<compile_context>
chip_gen: v6e
topology: v6e:2x2x1
jax: 0.10.0
libtpu: 0.0.40
codegen_flags: <defaults>
</compile_context>

<pallas_src>
import jax
import jax.numpy as jnp
from jax.experimental import pallas as pl
from jax.experimental.pallas import tpu as pltpu


NUM_SYS_PARAMS = 2


def _round_up(n, m):
    return (n + m - 1) // m * m


def _pad_to(a, shape):
    pads = [(0, t - s) for s, t in zip(a.shape, shape)]
    return jnp.pad(a, pads)


# ----------------------------------------------------------------------------
# Kernel
# ----------------------------------------------------------------------------
def osi_kernel(x_ref,
               w1_ref, b1_ref,
               w2_ref, b2_ref,
               w3_ref, b3_ref,
               w45_ref, b45_ref,
               w6_ref, b6_ref,
               o_ref):
    """Fused forward pass for one batch tile.

    Layers 1-3 use bf16 MXU operands with f32 accumulation; bias adds, tanh
    and the tiny fused estimator layers (45, 6) stay f32.
    """
    f32 = jnp.float32
    bf16 = jnp.bfloat16

    x = x_ref[...].astype(bf16)                                     # (tile, d_in)

    # context_encoder: Linear -> Tanh (x3)
    h = jnp.tanh(jnp.dot(x, w1_ref[...],
                         preferred_element_type=f32) + b1_ref[...])             # (tile, 256)
    h = jnp.tanh(jnp.dot(h.astype(bf16), w2_ref[...],
                         preferred_element_type=f32) + b2_ref[...])             # (tile, 128)
    h = jnp.tanh(jnp.dot(h.astype(bf16), w3_ref[...],
                         preferred_element_type=f32) + b3_ref[...])             # (tile, 64)

    # Fused linear layers 4 + 5 (layer 4 has no activation) followed by Tanh.
    e = jnp.tanh(jnp.dot(h, w45_ref[...],
                         preferred_element_type=f32) + b45_ref[...])            # (tile, 128 padded)

    # estimator output layer (only the first NUM_SYS_PARAMS columns are real).
    out = jnp.dot(e, w6_ref[...], preferred_element_type=f32) + b6_ref[...]     # (tile, 128 padded)
    o_ref[...] = out[:, :NUM_SYS_PARAMS].astype(o_ref.dtype)


# ----------------------------------------------------------------------------
# One-time parameter preparation (padding / casting / layer-4+5 fusion)
# ----------------------------------------------------------------------------
def prepare_params(params):
    """params: list of 6 (W(in,out) f32, b(1,out) f32) tuples (unpadded).

    Returns a flat tuple of kernel-ready arrays:
      (w1 bf16, b1 f32, w2 bf16, b2 f32, w3 bf16, b3 f32,
       w45 f32, b45 f32, w6 f32, b6 f32)
    """
    (w1, b1), (w2, b2), (w3, b3), (w4, b4), (w5, b5), (w6, b6) = params
    bf16 = jnp.bfloat16
    f32 = jnp.float32

    # Algebraic fusion of layers 4 and 5 (no activation between them).
    w45 = w4 @ w5                      # (64, 10)
    b45 = b4 @ w5 + b5                 # (1, 10)

    return (
        w1.astype(bf16),                              b1.astype(f32),        # (d_in,256), (1,256)
        w2.astype(bf16),                              b2.astype(f32),        # (256,128),  (1,128)
        w3.astype(bf16),                              b3.astype(f32),        # (128,64),   (1,64)
        _pad_to(w45, (64, 128)).astype(f32),          _pad_to(b45, (1, 128)).astype(f32),
        _pad_to(w6, (128, 128)).astype(f32),          _pad_to(b6, (1, 128)).astype(f32),
    )


# ----------------------------------------------------------------------------
# Wrapper
# ----------------------------------------------------------------------------
def osi_forward(history, prepared, *, tile_m=1024):
    """history: (B, (obs_dim + action_dim) * len_history) float32.
    prepared: output of prepare_params().
    Returns (B, NUM_SYS_PARAMS) float32."""
    B, d_in = history.shape

    # Tile heuristic: big tiles (amortize per-step overhead), multiple of 8,
    # and at least 2 grid steps for moderate B so the "parallel" grid axis
    # shards across both TensorCores on v7x.
    half = (B + 1) // 2
    tile = min(tile_m, _round_up(max(half, 8), 8))
    tile = max(8, min(tile, _round_up(B, 8)))
    grid = pl.cdiv(B, tile)

    # BlockSpecs: batch-tiled input/output; weights/biases are full constant-
    # index blocks (VMEM-resident, <0.5 MiB total, DMAed once).
    in_specs = [pl.BlockSpec((tile, d_in), lambda i: (i, 0))]
    for arr in prepared:
        in_specs.append(pl.BlockSpec(arr.shape, lambda i: (0, 0)))

    out_spec = pl.BlockSpec((tile, NUM_SYS_PARAMS), lambda i: (i, 0))
    out_shape = jax.ShapeDtypeStruct((B, NUM_SYS_PARAMS), jnp.float32)

    return pl.pallas_call(
        osi_kernel,
        out_shape=out_shape,
        grid_spec=pltpu.PrefetchScalarGridSpec(
            num_scalar_prefetch=0,
            grid=(grid,),
            in_specs=in_specs,
            out_specs=out_spec,
        ),
        compiler_params=pltpu.CompilerParams(
            dimension_semantics=("parallel",)),
    )(history, *prepared)


# ----------------------------------------------------------------------------
# Init + plain-JAX reference
# ----------------------------------------------------------------------------
def init_osi_params(key, obs_dim, action_dim, len_history):
    """Orthogonal init (std=sqrt(2)), bias=0, matching layer_init. Weights are
    stored pre-transposed as (in, out), biases as (1, out)."""
    d_in = (obs_dim + action_dim) * len_history
    dims = [(d_in, 256), (256, 128), (128, 64), (64, 10),   # context_encoder
            (10, 10), (10, NUM_SYS_PARAMS)]                  # estimator
    ortho = jax.nn.initializers.orthogonal(scale=jnp.sqrt(2.0))
    params = []
    keys = jax.random.split(key, len(dims))
    for k, (fan_in, fan_out) in zip(keys, dims):
        w = ortho(k, (fan_in, fan_out), jnp.float32)
        b = jnp.zeros((1, fan_out), jnp.float32)
        params.append((w, b))
    return params


def osi_reference(history, params):
    """Plain-JAX f32 reference for correctness checking."""
    (w1, b1), (w2, b2), (w3, b3), (w4, b4), (w5, b5), (w6, b6) = params
    h = jnp.tanh(history @ w1 + b1)
    h = jnp.tanh(h @ w2 + b2)
    h = jnp.tanh(h @ w3 + b3)
    c = h @ w4 + b4
    e = jnp.tanh(c @ w5 + b5)
    return e @ w6 + b6


if __name__ == "__main__":
    # Shapes consistent with the module: obs_dim=8, action_dim=2,
    # len_history=8 -> input feature dim (8+2)*8 = 80.
    obs_dim, action_dim, len_history = 8, 2, 8
    d_in = (obs_dim + action_dim) * len_history

    key = jax.random.PRNGKey(0)
    k_params, k_x1, k_x2 = jax.random.split(key, 3)
    params = init_osi_params(k_params, obs_dim, action_dim, len_history)
    prepared = prepare_params(params)   # one-time pad/cast/fuse, out of hot path

    # bf16 MXU operands (layers 1-3) with f32 accumulation and f32 activations.
    TOL = dict(atol=5e-2, rtol=5e-2)

    # 1) small batch (tile auto-shrinks to 8, single grid step)
    hist_small = jax.random.normal(k_x1, (8, d_in), dtype=jnp.float32)
    out_small = jax.block_until_ready(osi_forward(hist_small, prepared))
    ref_small = osi_reference(hist_small, params)
    assert out_small.shape == (8, NUM_SYS_PARAMS)
    assert jnp.allclose(out_small, ref_small, **TOL), "mismatch vs reference (small)"

    # 2) ragged batch exercising the masked final block + 2-step "parallel" grid
    hist_big = jax.random.normal(k_x2, (200, d_in), dtype=jnp.float32)
    out_big = jax.block_until_ready(osi_forward(hist_big, prepared))
    ref_big = osi_reference(hist_big, params)
    assert out_big.shape == (200, NUM_SYS_PARAMS)
    assert jnp.allclose(out_big, ref_big, **TOL), "mismatch vs reference (ragged)"

    print("KERNEL_OK")
</pallas_src>

<mosaic_0001>
module attributes {stable_mosaic.version = 11 : i64} {
  func.func @osi_kernel(%arg0: i32, %arg1: memref<8x80xf32, #tpu.memory_space<vmem>>, %arg2: memref<80x256xbf16, #tpu.memory_space<vmem>>, %arg3: memref<1x256xf32, #tpu.memory_space<vmem>>, %arg4: memref<256x128xbf16, #tpu.memory_space<vmem>>, %arg5: memref<1x128xf32, #tpu.memory_space<vmem>>, %arg6: memref<128x64xbf16, #tpu.memory_space<vmem>>, %arg7: memref<1x64xf32, #tpu.memory_space<vmem>>, %arg8: memref<64x128xf32, #tpu.memory_space<vmem>>, %arg9: memref<1x128xf32, #tpu.memory_space<vmem>>, %arg10: memref<128x128xf32, #tpu.memory_space<vmem>>, %arg11: memref<1x128xf32, #tpu.memory_space<vmem>>, %arg12: memref<8x2xf32, #tpu.memory_space<vmem>>) attributes {dimension_semantics = [#tpu.dimension_semantics<parallel>], iteration_bounds = array<i64: 1>, scalar_prefetch = 0 : i64, scratch_operands = 0 : i64, tpu.core_type = #tpu.core_type<tc>, window_params = [{transform_indices = @transform_0, window_bounds = array<i64: 8, 80>}, {pipeline_mode = #tpu.pipeline_mode<synchronous>, transform_indices = @transform_1, window_bounds = array<i64: 80, 256>}, {pipeline_mode = #tpu.pipeline_mode<synchronous>, transform_indices = @transform_2, window_bounds = array<i64: 1, 256>}, {pipeline_mode = #tpu.pipeline_mode<synchronous>, transform_indices = @transform_3, window_bounds = array<i64: 256, 128>}, {pipeline_mode = #tpu.pipeline_mode<synchronous>, transform_indices = @transform_4, window_bounds = array<i64: 1, 128>}, {pipeline_mode = #tpu.pipeline_mode<synchronous>, transform_indices = @transform_5, window_bounds = array<i64: 128, 64>}, {pipeline_mode = #tpu.pipeline_mode<synchronous>, transform_indices = @transform_6, window_bounds = array<i64: 1, 64>}, {pipeline_mode = #tpu.pipeline_mode<synchronous>, transform_indices = @transform_7, window_bounds = array<i64: 64, 128>}, {pipeline_mode = #tpu.pipeline_mode<synchronous>, transform_indices = @transform_8, window_bounds = array<i64: 1, 128>}, {pipeline_mode = #tpu.pipeline_mode<synchronous>, transform_indices = @transform_9, window_bounds = array<i64: 128, 128>}, {pipeline_mode = #tpu.pipeline_mode<synchronous>, transform_indices = @transform_10, window_bounds = array<i64: 1, 128>}, {transform_indices = @transform_11, window_bounds = array<i64: 8, 2>}]} {
    %c0 = arith.constant 0 : index
    %c0_0 = arith.constant 0 : index
    %0 = vector.load %arg1[%c0, %c0_0] : memref<8x80xf32, #tpu.memory_space<vmem>>, vector<8x80xf32>
    %1 = arith.truncf %0 : vector<8x80xf32> to vector<8x80xbf16>
    %c0_1 = arith.constant 0 : index
    %c0_2 = arith.constant 0 : index
    %2 = vector.load %arg2[%c0_1, %c0_2] : memref<80x256xbf16, #tpu.memory_space<vmem>>, vector<80x256xbf16>
    %cst = arith.constant dense<0.000000e+00> : vector<8x256xf32>
    %3 = tpu.matmul %1, %2, %cst {dimension_numbers = #tpu.dot_dimension_numbers<[1], [0], [0], [1], [0, 0, 1, 1], [], []>} : vector<8x80xbf16>, vector<80x256xbf16>, vector<8x256xf32> -> vector<8x256xf32>
    %c0_3 = arith.constant 0 : index
    %c0_4 = arith.constant 0 : index
    %4 = vector.load %arg3[%c0_3, %c0_4] : memref<1x256xf32, #tpu.memory_space<vmem>>, vector<1x256xf32>
    %5 = vector.broadcast %4 : vector<1x256xf32> to vector<8x256xf32>
    %6 = arith.addf %3, %5 : vector<8x256xf32>
    %7 = math.tanh %6 : vector<8x256xf32>
    %8 = arith.truncf %7 : vector<8x256xf32> to vector<8x256xbf16>
    %c0_5 = arith.constant 0 : index
    %c0_6 = arith.constant 0 : index
    %9 = vector.load %arg4[%c0_5, %c0_6] : memref<256x128xbf16, #tpu.memory_space<vmem>>, vector<256x128xbf16>
    %cst_7 = arith.constant dense<0.000000e+00> : vector<8x128xf32>
    %10 = tpu.matmul %8, %9, %cst_7 {dimension_numbers = #tpu.dot_dimension_numbers<[1], [0], [0], [1], [0, 0, 1, 1], [], []>} : vector<8x256xbf16>, vector<256x128xbf16>, vector<8x128xf32> -> vector<8x128xf32>
    %c0_8 = arith.constant 0 : index
    %c0_9 = arith.constant 0 : index
    %11 = vector.load %arg5[%c0_8, %c0_9] : memref<1x128xf32, #tpu.memory_space<vmem>>, vector<1x128xf32>
    %12 = vector.broadcast %11 : vector<1x128xf32> to vector<8x128xf32>
    %13 = arith.addf %10, %12 : vector<8x128xf32>
    %14 = math.tanh %13 : vector<8x128xf32>
    %15 = arith.truncf %14 : vector<8x128xf32> to vector<8x128xbf16>
    %c0_10 = arith.constant 0 : index
    %c0_11 = arith.constant 0 : index
    %16 = vector.load %arg6[%c0_10, %c0_11] : memref<128x64xbf16, #tpu.memory_space<vmem>>, vector<128x64xbf16>
    %cst_12 = arith.constant dense<0.000000e+00> : vector<8x64xf32>
    %17 = tpu.matmul %15, %16, %cst_12 {dimension_numbers = #tpu.dot_dimension_numbers<[1], [0], [0], [1], [0, 0, 1, 1], [], []>} : vector<8x128xbf16>, vector<128x64xbf16>, vector<8x64xf32> -> vector<8x64xf32>
    %c0_13 = arith.constant 0 : index
    %c0_14 = arith.constant 0 : index
    %18 = vector.load %arg7[%c0_13, %c0_14] : memref<1x64xf32, #tpu.memory_space<vmem>>, vector<1x64xf32>
    %19 = vector.broadcast %18 : vector<1x64xf32> to vector<8x64xf32>
    %20 = arith.addf %17, %19 : vector<8x64xf32>
    %21 = math.tanh %20 : vector<8x64xf32>
    %c0_15 = arith.constant 0 : index
    %c0_16 = arith.constant 0 : index
    %22 = vector.load %arg8[%c0_15, %c0_16] : memref<64x128xf32, #tpu.memory_space<vmem>>, vector<64x128xf32>
    %cst_17 = arith.constant dense<0.000000e+00> : vector<8x128xf32>
    %23 = tpu.matmul %21, %22, %cst_17 {dimension_numbers = #tpu.dot_dimension_numbers<[1], [0], [0], [1], [0, 0, 1, 1], [], []>} : vector<8x64xf32>, vector<64x128xf32>, vector<8x128xf32> -> vector<8x128xf32>
    %c0_18 = arith.constant 0 : index
    %c0_19 = arith.constant 0 : index
    %24 = vector.load %arg9[%c0_18, %c0_19] : memref<1x128xf32, #tpu.memory_space<vmem>>, vector<1x128xf32>
    %25 = vector.broadcast %24 : vector<1x128xf32> to vector<8x128xf32>
    %26 = arith.addf %23, %25 : vector<8x128xf32>
    %27 = math.tanh %26 : vector<8x128xf32>
    %c0_20 = arith.constant 0 : index
    %c0_21 = arith.constant 0 : index
    %28 = vector.load %arg10[%c0_20, %c0_21] : memref<128x128xf32, #tpu.memory_space<vmem>>, vector<128x128xf32>
    %cst_22 = arith.constant dense<0.000000e+00> : vector<8x128xf32>
    %29 = tpu.matmul %27, %28, %cst_22 {dimension_numbers = #tpu.dot_dimension_numbers<[1], [0], [0], [1], [0, 0, 1, 1], [], []>} : vector<8x128xf32>, vector<128x128xf32>, vector<8x128xf32> -> vector<8x128xf32>
    %c0_23 = arith.constant 0 : index
    %c0_24 = arith.constant 0 : index
    %30 = vector.load %arg11[%c0_23, %c0_24] : memref<1x128xf32, #tpu.memory_space<vmem>>, vector<1x128xf32>
    %31 = vector.broadcast %30 : vector<1x128xf32> to vector<8x128xf32>
    %32 = arith.addf %29, %31 : vector<8x128xf32>
    %33 = vector.extract_strided_slice %32 {offsets = [0, 0], sizes = [8, 2], strides = [1, 1]} : vector<8x128xf32> to vector<8x2xf32>
    %c0_25 = arith.constant 0 : index
    %c0_26 = arith.constant 0 : index
    %34 = vector.load %arg12[%c0_25, %c0_26] : memref<8x2xf32, #tpu.memory_space<vmem>>, vector<8x2xf32>
    tpu.vector_store %arg12[%c0_25, %c0_26], %33 {strides = array<i32>} : memref<8x2xf32, #tpu.memory_space<vmem>>, vector<8x2xf32>,
    return
  }
  func.func @transform_0(%arg0: i32) -> (i32, i32) {
    %c0_i32 = arith.constant 0 : i32
    %c0_i32_0 = arith.constant 0 : i32
    return %arg0, %c0_i32 : i32, i32
  }
  func.func @transform_1(%arg0: i32) -> (i32, i32) {
    %c0_i32 = arith.constant 0 : i32
    %c0_i32_0 = arith.constant 0 : i32
    %c0_i32_1 = arith.constant 0 : i32
    return %c0_i32, %c0_i32_0 : i32, i32
  }
  func.func @transform_2(%arg0: i32) -> (i32, i32) {
    %c0_i32 = arith.constant 0 : i32
    %c0_i32_0 = arith.constant 0 : i32
    %c0_i32_1 = arith.constant 0 : i32
    return %c0_i32, %c0_i32_0 : i32, i32
  }
  func.func @transform_3(%arg0: i32) -> (i32, i32) {
    %c0_i32 = arith.constant 0 : i32
    %c0_i32_0 = arith.constant 0 : i32
    %c0_i32_1 = arith.constant 0 : i32
    return %c0_i32, %c0_i32_0 : i32, i32
  }
  func.func @transform_4(%arg0: i32) -> (i32, i32) {
    %c0_i32 = arith.constant 0 : i32
    %c0_i32_0 = arith.constant 0 : i32
    %c0_i32_1 = arith.constant 0 : i32
    return %c0_i32, %c0_i32_0 : i32, i32
  }
  func.func @transform_5(%arg0: i32) -> (i32, i32) {
    %c0_i32 = arith.constant 0 : i32
    %c0_i32_0 = arith.constant 0 : i32
    %c0_i32_1 = arith.constant 0 : i32
    return %c0_i32, %c0_i32_0 : i32, i32
  }
  func.func @transform_6(%arg0: i32) -> (i32, i32) {
    %c0_i32 = arith.constant 0 : i32
    %c0_i32_0 = arith.constant 0 : i32
    %c0_i32_1 = arith.constant 0 : i32
    return %c0_i32, %c0_i32_0 : i32, i32
  }
  func.func @transform_7(%arg0: i32) -> (i32, i32) {
    %c0_i32 = arith.constant 0 : i32
    %c0_i32_0 = arith.constant 0 : i32
    %c0_i32_1 = arith.constant 0 : i32
    return %c0_i32, %c0_i32_0 : i32, i32
  }
  func.func @transform_8(%arg0: i32) -> (i32, i32) {
    %c0_i32 = arith.constant 0 : i32
    %c0_i32_0 = arith.constant 0 : i32
    %c0_i32_1 = arith.constant 0 : i32
    return %c0_i32, %c0_i32_0 : i32, i32
  }
  func.func @transform_9(%arg0: i32) -> (i32, i32) {
    %c0_i32 = arith.constant 0 : i32
    %c0_i32_0 = arith.constant 0 : i32
    %c0_i32_1 = arith.constant 0 : i32
    return %c0_i32, %c0_i32_0 : i32, i32
  }
  func.func @transform_10(%arg0: i32) -> (i32, i32) {
    %c0_i32 = arith.constant 0 : i32
    %c0_i32_0 = arith.constant 0 : i32
    %c0_i32_1 = arith.constant 0 : i32
    return %c0_i32, %c0_i32_0 : i32, i32
  }
  func.func @transform_11(%arg0: i32) -> (i32, i32) {
    %c0_i32 = arith.constant 0 : i32
    %c0_i32_0 = arith.constant 0 : i32
    return %arg0, %c0_i32 : i32, i32
  }
}

</mosaic_0001>

<llo_original>
// kernel: tpu_custom_call.1
$region0: #{tpu_custom_call.1}
  #allocation0 [shape = 'u32[]', space=smem, size = 0x4, offset = 0x4, fixed_abs, tag = 'smem constant byte address 0x4 - core index']
  #allocation1 [shape = 'u32[144,128]{1,0:T(1,128)}', space=vmem, size = 0x12000, scoped, tag = 'internal scratch']
  %s0 = inlined_call_operand.vmem [shape: f32[8,80], index: 0, kind: input, shape index: {}]
  %s1 = inlined_call_operand.vmem [shape: bf16[80,256], index: 1, kind: input, shape index: {}]
  %s2 = inlined_call_operand.vmem [shape: f32[1,256], index: 2, kind: input, shape index: {}]
  %s3 = inlined_call_operand.hbm [shape: bf16[256,128], index: 3, kind: input, shape index: {}]
  %s4 = inlined_call_operand.vmem [shape: f32[1,128], index: 4, kind: input, shape index: {}]
  %s5 = inlined_call_operand.vmem [shape: bf16[128,64], index: 5, kind: input, shape index: {}]
  %s6 = inlined_call_operand.vmem [shape: f32[1,64], index: 6, kind: input, shape index: {}]
  %s7 = inlined_call_operand.hbm [shape: f32[64,128], index: 7, kind: input, shape index: {}]
  %s8 = inlined_call_operand.vmem [shape: f32[1,128], index: 8, kind: input, shape index: {}]
  %s9 = inlined_call_operand.hbm [shape: f32[128,128], index: 9, kind: input, shape index: {}]
  %s10 = inlined_call_operand.vmem [shape: f32[1,128], index: 10, kind: input, shape index: {}]
  %s11 = inlined_call_operand.vmem [shape: f32[8,2], index: 11, kind: output, shape index: {}]
  %s12 = sld [smem:[#allocation0]]
  $region66: #{tpu_custom_call.1} parent=0
    _
  %s14 = ssub.s32 1, %s12
  %s15 = scalar_select 0, %s14, %s12
  $region1: #{tpu_custom_call.1} parent=0
    #allocation2 [shape = 'u8[65536]{0}', space=vmem, size = 0x10000, scoped, tag = 'input window, operand 3, single buffered']
    #allocation3 [shape = 's32[1]{0}', space=sflag, size = 0x4, scoped, tag = 'scoped memory for tpu_custom_call.1']
    #allocation4 [shape = 'u8[32768]{0}', space=vmem, size = 0x8000, scoped, tag = 'input window, operand 7, single buffered']
    #allocation5 [shape = 's32[1]{0}', space=sflag, size = 0x4, scoped, tag = 'scoped memory for tpu_custom_call.1']
    #allocation6 [shape = 'u8[65536]{0}', space=vmem, size = 0x10000, scoped, tag = 'input window, operand 9, single buffered']
    %16 = vsyncpa [#allocation3], 0
    %17 = vsyncpa [#allocation5], 0
    // Predicated region
    $region2: #{tpu_custom_call.1} parent=1 // pred_check
      _
    $region3: #{tpu_custom_call.1} parent=1 // pred_check_branch
      %19 = sbr.rel (0) target = $region5
    $region4: #{tpu_custom_call.1} parent=1 // pred_region
      _
    $region5: #{tpu_custom_call.1} parent=1 // pred_fallthru
      _
    // Predicated region
    $region6: #{tpu_custom_call.1} parent=1 // pred_check
      _
    $region7: #{tpu_custom_call.1} parent=1 // pred_check_branch
      %21 = sbr.rel (0) target = $region9
    $region8: #{tpu_custom_call.1} parent=1 // pred_region
      _
    $region9: #{tpu_custom_call.1} parent=1 // pred_fallthru
      _
    // Predicated region
    $region10: #{tpu_custom_call.1} parent=1 // pred_check
      _
    $region11: #{tpu_custom_call.1} parent=1 // pred_check_branch
      %23 = sbr.rel (0) target = $region13
    $region12: #{tpu_custom_call.1} parent=1 // pred_region
      _
    $region13: #{tpu_custom_call.1} parent=1 // pred_fallthru
      _
    // Predicated region
    $region14: #{tpu_custom_call.1} parent=1 // pred_check
      _
    $region15: #{tpu_custom_call.1} parent=1 // pred_check_branch
      %25 = sbr.rel (0) target = $region17
    $region16: #{tpu_custom_call.1} parent=1 // pred_region
      %s27 = ssub.s32 2048, 2048
      %28 = vsyncadd [#allocation3], %s27
      %s29 = sshll.u32 [#allocation2], 4
      %s30 = int_to_ptr.vmem [resolvable:$true] %s29
      %35 = dma.hbm_to_vmem [thread:$0]  %s3, 2048, %s30, [#allocation3], 64, 64, 4
    $region17: #{tpu_custom_call.1} parent=1 // pred_fallthru
      _
    // Predicated region
    $region18: #{tpu_custom_call.1} parent=1 // pred_check
      _
    $region19: #{tpu_custom_call.1} parent=1 // pred_check_branch
      %37 = sbr.rel (0) target = $region21
    $region20: #{tpu_custom_call.1} parent=1 // pred_region
      _
    $region21: #{tpu_custom_call.1} parent=1 // pred_fallthru
      _
    // Predicated region
    $region22: #{tpu_custom_call.1} parent=1 // pred_check
      _
    $region23: #{tpu_custom_call.1} parent=1 // pred_check_branch
      %39 = sbr.rel (0) target = $region25
    $region24: #{tpu_custom_call.1} parent=1 // pred_region
      _
    $region25: #{tpu_custom_call.1} parent=1 // pred_fallthru
      _
    // Predicated region
    $region26: #{tpu_custom_call.1} parent=1 // pred_check
      _
    $region27: #{tpu_custom_call.1} parent=1 // pred_check_branch
      %41 = sbr.rel (0) target = $region29
    $region28: #{tpu_custom_call.1} parent=1 // pred_region
      _
    $region29: #{tpu_custom_call.1} parent=1 // pred_fallthru
      _
    // Predicated region
    $region30: #{tpu_custom_call.1} parent=1 // pred_check
      _
    $region31: #{tpu_custom_call.1} parent=1 // pred_check_branch
      %43 = sbr.rel (0) target = $region33
    $region32: #{tpu_custom_call.1} parent=1 // pred_region
      %s45 = ssub.s32 1024, 1024
      %46 = vsyncadd [#allocation5], %s45
      %s47 = sshll.u32 [#allocation4], 4
      %s48 = int_to_ptr.vmem [resolvable:$true] %s47
      %53 = dma.hbm_to_vmem [thread:$0]  %s7, 1024, %s48, [#allocation5], 128, 128, 8
    $region33: #{tpu_custom_call.1} parent=1 // pred_fallthru
      _
    // Predicated region
    $region34: #{tpu_custom_call.1} parent=1 // pred_check
      _
    $region35: #{tpu_custom_call.1} parent=1 // pred_check_branch
      %55 = sbr.rel (0) target = $region37
    $region36: #{tpu_custom_call.1} parent=1 // pred_region
      _
    $region37: #{tpu_custom_call.1} parent=1 // pred_fallthru
      _
    // Predicated region
    $region38: #{tpu_custom_call.1} parent=1 // pred_check
      _
    $region39: #{tpu_custom_call.1} parent=1 // pred_check_branch
      %57 = sbr.rel (0) target = $region41
    $region40: #{tpu_custom_call.1} parent=1 // pred_region
      %s59 = ssub.s32 2048, 2048
      %60 = vsyncadd [#allocation5], %s59
      %s61 = sshll.u32 [#allocation6], 4
      %s62 = int_to_ptr.vmem [resolvable:$true] %s61
      %67 = dma.hbm_to_vmem [thread:$0]  %s9, 2048, %s62, [#allocation5], 128, 128, 8
    $region41: #{tpu_custom_call.1} parent=1 // pred_fallthru
      _
    // Predicated region
    $region42: #{tpu_custom_call.1} parent=1 // pred_check
      _
    $region43: #{tpu_custom_call.1} parent=1 // pred_check_branch
      %69 = sbr.rel (0) target = $region45
    $region44: #{tpu_custom_call.1} parent=1 // pred_region
      _
    $region45: #{tpu_custom_call.1} parent=1 // pred_fallthru
      _
    // Predicated region
    $region46: #{tpu_custom_call.1} parent=1 // pred_check
      _
    $region47: #{tpu_custom_call.1} parent=1 // pred_check_branch
      %71 = sbr.rel (0) target = $region49
    $region48: #{tpu_custom_call.1} parent=1 // pred_region
      %72 = dma.done [#allocation3], 2048
    $region49: #{tpu_custom_call.1} parent=1 // pred_fallthru
      _
    // Predicated region
    $region50: #{tpu_custom_call.1} parent=1 // pred_check
      _
    $region51: #{tpu_custom_call.1} parent=1 // pred_check_branch
      %74 = sbr.rel (0) target = $region53
    $region52: #{tpu_custom_call.1} parent=1 // pred_region
      %75 = dma.done [#allocation5], 1024
    $region53: #{tpu_custom_call.1} parent=1 // pred_fallthru
      _
    // Predicated region
    $region54: #{tpu_custom_call.1} parent=1 // pred_check
      _
    $region55: #{tpu_custom_call.1} parent=1 // pred_check_branch
      %77 = sbr.rel (0) target = $region57
    $region56: #{tpu_custom_call.1} parent=1 // pred_region
      %78 = dma.done [#allocation5], 2048
    $region57: #{tpu_custom_call.1} parent=1 // pred_fallthru
      _
    %v80 = vld [vmem:[%s0] sm:$0xff]
    %v81 = vpack.c.bf16 %v80, %v80
    %v82 = vld [vmem:[%s1] sm:$0xff]
    %v83 = vld [vmem:[%s1 + $0x8] sm:$0xff]
    %v84 = vld [vmem:[%s1 + $0x10] sm:$0xff]
    %v85 = vld [vmem:[%s1 + $0x18] sm:$0xff]
    %v86 = vld [vmem:[%s1 + $0x20] sm:$0xff]
    %v87 = vld [vmem:[%s1 + $0x28] sm:$0xff]
    %v88 = vld [vmem:[%s1 + $0x30] sm:$0xff]
    %v89 = vld [vmem:[%s1 + $0x38] sm:$0xff]
    %v90 = vld [vmem:[%s1 + $0x40] sm:$0xff]
    %v91 = vld [vmem:[%s1 + $0x48] sm:$0xff]
    %v92 = vld [vmem:[%s2] sm:$0x3]
    %v94 = vlaneseq
    %v95 = vshrl.u32 %v94, 7
    %v96 = vsub.s32 0, %v95
    %v97 = vrot.slane %v92, %v96
    %v98 = vlaneseq
    %v99 = vshrl.u32 %v98, 7
    %v100 = vsub.s32 1, %v99
    %v101 = vrot.slane %v92, %v100
    %v114 = vunpack.c.l.b16 %v82
    %v115 = vunpack.c.h.b16 %v82
    %v116 = vunpack.c.l.b16 %v83
    %v117 = vunpack.c.h.b16 %v83
    %v118 = vunpack.c.l.b16 %v84
    %v119 = vunpack.c.h.b16 %v84
    %v120 = vunpack.c.l.b16 %v85
    %v121 = vunpack.c.h.b16 %v85
    %v122 = vunpack.c.l.b16 %v86
    %v123 = vunpack.c.h.b16 %v86
    %v124 = vunpack.c.l.b16 %v87
    %v125 = vunpack.c.h.b16 %v87
    %v126 = vunpack.c.l.b16 %v88
    %v127 = vunpack.c.h.b16 %v88
    %v128 = vunpack.c.l.b16 %v89
    %v129 = vunpack.c.h.b16 %v89
    %v130 = vunpack.c.l.b16 %v90
    %v131 = vunpack.c.h.b16 %v90
    %v132 = vunpack.c.l.b16 %v91
    %v133 = vunpack.c.h.b16 %v91
    %v134 = vpack.c.b16 %v116, %v114
    %v135 = vpack.c.b16 %v117, %v115
    %v136 = vpack.c.b16 %v120, %v118
    %v137 = vpack.c.b16 %v121, %v119
    %v138 = vpack.c.b16 %v124, %v122
    %v139 = vpack.c.b16 %v125, %v123
    %v140 = vpack.c.b16 %v128, %v126
    %v141 = vpack.c.b16 %v129, %v127
    %v142 = vpack.c.b16 %v132, %v130
    %v143 = vpack.c.b16 %v133, %v131
    %vm154 = vcmask 654336
    %v156 = vsel %vm154, %v81, 0
    %158 = vmatprep.subr.bf16.mxu0 0
    %159 = vmatpush1.bf16.msra.mxu0 0
    %160 = vmatprep.subr.bf16.mxu0 0
    %161 = vmatpush1.bf16.msra.mxu0 0
    %162 = vmatprep.subr.bf16.mxu0 0
    %163 = vmatpush1.bf16.msra.mxu0 0
    %164 = vmatprep.subr.bf16.mxu0 %v143
    %165 = vmatpush1.bf16.msra.mxu0 %v142
    %166 = vmatprep.subr.bf16.mxu0 %v141
    %167 = vmatpush1.bf16.msra.mxu0 %v140
    %168 = vmatprep.subr.bf16.mxu0 %v139
    %169 = vmatpush1.bf16.msra.mxu0 %v138
    %170 = vmatprep.subr.bf16.mxu0 %v137
    %171 = vmatpush1.bf16.msra.mxu0 %v136
    %172 = vmatprep.subr.bf16.mxu0 %v135
    %173 = vmatpush1.bf16.msra.mxu0 %v134
    %174 = vmatprep.subr.bf16.mxu0 0
    %175 = vmatpush2.bf16.msra.mxu0 0
    %176 = vmatprep.subr.bf16.mxu0 0
    %177 = vmatpush2.bf16.msra.mxu0 0
    %178 = vmatprep.subr.bf16.mxu0 0
    %179 = vmatpush2.bf16.msra.mxu0 0
    %180 = vmatprep.subr.bf16.mxu0 0
    %181 = vmatpush2.bf16.msra.mxu0 0
    %182 = vmatprep.subr.bf16.mxu0 0
    %183 = vmatpush2.bf16.msra.mxu0 0
    %184 = vmatprep.subr.bf16.mxu0 0
    %185 = vmatpush2.bf16.msra.mxu0 0
    %186 = vmatprep.subr.bf16.mxu0 0
    %187 = vmatpush2.bf16.msra.mxu0 0
    %188 = vmatprep.subr.bf16.mxu0 0
    %189 = vmatpush2.bf16.msra.mxu0 0
    %190 = vmatprep.mubr.bf16.mxu0 0
    %191 = vmatmul.mubr.bf16.gmra.mxu0 %v156
    %v192 = vpop.f32.mrf.mxu0
    %v193 = vadd.f32 %v97, %v192
    %v194 = vpop.f32.mrf.mxu0
    %v195 = vadd.f32 %v101, %v194
    %v196 = vpop.f32.mrf.mxu0
    %v197 = vpop.f32.mrf.mxu0
    %198 = vdwg.mxu0
    %v199 = vtanh.pop %v193
    %v200 = vtanh.pop %v195
    %v201 = vpack.c.bf16 %v199, %v199
    %v202 = vpack.c.bf16 %v200, %v200
    %v203 = vld [vmem:[#allocation2] sm:$0xf]
    %v204 = vld [vmem:[#allocation2 + $0x4] sm:$0xf]
    %v205 = vld [vmem:[#allocation2 + $0x8] sm:$0xf]
    %v206 = vld [vmem:[#allocation2 + $0xc] sm:$0xf]
    %v207 = vld [vmem:[#allocation2 + $0x10] sm:$0xf]
    %v208 = vld [vmem:[#allocation2 + $0x14] sm:$0xf]
    %v209 = vld [vmem:[#allocation2 + $0x18] sm:$0xf]
    %v210 = vld [vmem:[#allocation2 + $0x1c] sm:$0xf]
    %v211 = vld [vmem:[#allocation2 + $0x20] sm:$0xf]
    %v212 = vld [vmem:[#allocation2 + $0x24] sm:$0xf]
    %v213 = vld [vmem:[#allocation2 + $0x28] sm:$0xf]
    %v214 = vld [vmem:[#allocation2 + $0x2c] sm:$0xf]
    %v215 = vld [vmem:[#allocation2 + $0x30] sm:$0xf]
    %v216 = vld [vmem:[#allocation2 + $0x34] sm:$0xf]
    %v217 = vld [vmem:[#allocation2 + $0x38] sm:$0xf]
    %v218 = vld [vmem:[#allocation2 + $0x3c] sm:$0xf]
    %v219 = vld [vmem:[#allocation2 + $0x40] sm:$0xf]
    %v220 = vld [vmem:[#allocation2 + $0x44] sm:$0xf]
    %v221 = vld [vmem:[#allocation2 + $0x48] sm:$0xf]
    %v222 = vld [vmem:[#allocation2 + $0x4c] sm:$0xf]
    %v223 = vld [vmem:[#allocation2 + $0x50] sm:$0xf]
    %v224 = vld [vmem:[#allocation2 + $0x54] sm:$0xf]
    %v225 = vld [vmem:[#allocation2 + $0x58] sm:$0xf]
    %v226 = vld [vmem:[#allocation2 + $0x5c] sm:$0xf]
    %v227 = vld [vmem:[#allocation2 + $0x60] sm:$0xf]
    %v228 = vld [vmem:[#allocation2 + $0x64] sm:$0xf]
    %v229 = vld [vmem:[#allocation2 + $0x68] sm:$0xf]
    %v230 = vld [vmem:[#allocation2 + $0x6c] sm:$0xf]
    %v231 = vld [vmem:[#allocation2 + $0x70] sm:$0xf]
    %v232 = vld [vmem:[#allocation2 + $0x74] sm:$0xf]
    %v233 = vld [vmem:[#allocation2 + $0x78] sm:$0xf]
    %v234 = vld [vmem:[#allocation2 + $0x7c] sm:$0xf]
    %v235 = vld [vmem:[%s4] sm:$0x1]
    %v237 = vlaneseq
    %v238 = vshrl.u32 %v237, 7
    %v239 = vsub.s32 0, %v238
    %v240 = vrot.slane %v235, %v239
    %v274 = vunpack.c.l.b16 %v203
    %v275 = vunpack.c.l.b16 %v204
    %v276 = vunpack.c.l.b16 %v205
    %v277 = vunpack.c.l.b16 %v206
    %v278 = vunpack.c.l.b16 %v207
    %v279 = vunpack.c.l.b16 %v208
    %v280 = vunpack.c.l.b16 %v209
    %v281 = vunpack.c.l.b16 %v210
    %v282 = vunpack.c.l.b16 %v211
    %v283 = vunpack.c.l.b16 %v212
    %v284 = vunpack.c.l.b16 %v213
    %v285 = vunpack.c.l.b16 %v214
    %v286 = vunpack.c.l.b16 %v215
    %v287 = vunpack.c.l.b16 %v216
    %v288 = vunpack.c.l.b16 %v217
    %v289 = vunpack.c.l.b16 %v218
    %v290 = vunpack.c.l.b16 %v219
    %v291 = vunpack.c.l.b16 %v220
    %v292 = vunpack.c.l.b16 %v221
    %v293 = vunpack.c.l.b16 %v222
    %v294 = vunpack.c.l.b16 %v223
    %v295 = vunpack.c.l.b16 %v224
    %v296 = vunpack.c.l.b16 %v225
    %v297 = vunpack.c.l.b16 %v226
    %v298 = vunpack.c.l.b16 %v227
    %v299 = vunpack.c.l.b16 %v228
    %v300 = vunpack.c.l.b16 %v229
    %v301 = vunpack.c.l.b16 %v230
    %v302 = vunpack.c.l.b16 %v231
    %v303 = vunpack.c.l.b16 %v232
    %v304 = vunpack.c.l.b16 %v233
    %v305 = vunpack.c.l.b16 %v234
    %v306 = vpack.c.b16 %v275, %v274
    %v307 = vpack.c.b16 %v277, %v276
    %v308 = vpack.c.b16 %v279, %v278
    %v309 = vpack.c.b16 %v281, %v280
    %v310 = vpack.c.b16 %v283, %v282
    %v311 = vpack.c.b16 %v285, %v284
    %v312 = vpack.c.b16 %v287, %v286
    %v313 = vpack.c.b16 %v289, %v288
    %v314 = vpack.c.b16 %v291, %v290
    %v315 = vpack.c.b16 %v293, %v292
    %v316 = vpack.c.b16 %v295, %v294
    %v317 = vpack.c.b16 %v297, %v296
    %v318 = vpack.c.b16 %v299, %v298
    %v319 = vpack.c.b16 %v301, %v300
    %v320 = vpack.c.b16 %v303, %v302
    %v321 = vpack.c.b16 %v305, %v304
    %338 = vmatprep.subr.bf16.mxu0 0
    %339 = vmatpush1.bf16.msra.mxu0 %v313
    %340 = vmatprep.subr.bf16.mxu0 0
    %341 = vmatpush1.bf16.msra.mxu0 %v312
    %342 = vmatprep.subr.bf16.mxu0 0
    %343 = vmatpush1.bf16.msra.mxu0 %v311
    %344 = vmatprep.subr.bf16.mxu0 0
    %345 = vmatpush1.bf16.msra.mxu0 %v310
    %346 = vmatprep.subr.bf16.mxu0 0
    %347 = vmatpush1.bf16.msra.mxu0 %v309
    %348 = vmatprep.subr.bf16.mxu0 0
    %349 = vmatpush1.bf16.msra.mxu0 %v308
    %350 = vmatprep.subr.bf16.mxu0 0
    %351 = vmatpush1.bf16.msra.mxu0 %v307
    %352 = vmatprep.subr.bf16.mxu0 0
    %353 = vmatpush1.bf16.msra.mxu0 %v306
    %354 = vmatprep.subr.bf16.mxu0 0
    %355 = vmatpush2.bf16.msra.mxu0 %v321
    %356 = vmatprep.subr.bf16.mxu0 0
    %357 = vmatpush2.bf16.msra.mxu0 %v320
    %358 = vmatprep.subr.bf16.mxu0 0
    %359 = vmatpush2.bf16.msra.mxu0 %v319
    %360 = vmatprep.subr.bf16.mxu0 0
    %361 = vmatpush2.bf16.msra.mxu0 %v318
    %362 = vmatprep.subr.bf16.mxu0 0
    %363 = vmatpush2.bf16.msra.mxu0 %v317
    %364 = vmatprep.subr.bf16.mxu0 0
    %365 = vmatpush2.bf16.msra.mxu0 %v316
    %366 = vmatprep.subr.bf16.mxu0 0
    %367 = vmatpush2.bf16.msra.mxu0 %v315
    %368 = vmatprep.subr.bf16.mxu0 0
    %369 = vmatpush2.bf16.msra.mxu0 %v314
    %370 = vmatprep.mubr.bf16.mxu0 %v202
    %371 = vmatmul.mubr.bf16.gmra.mxu0 %v201
    %v372 = vpop.f32.mrf.mxu0
    %v373 = vadd.f32 %v240, %v372
    %v374 = vpop.f32.mrf.mxu0
    %v375 = vpop.f32.mrf.mxu0
    %v376 = vpop.f32.mrf.mxu0
    %377 = vdwg.mxu0
    %v378 = vtanh.pop %v373
    %v379 = vpack.c.bf16 %v378, %v378
    %v380 = vld [vmem:[%s5] sm:$0xf]
    %v381 = vld [vmem:[%s5 + $0x4] sm:$0xf]
    %v382 = vld [vmem:[%s5 + $0x8] sm:$0xf]
    %v383 = vld [vmem:[%s5 + $0xc] sm:$0xf]
    %v384 = vld [vmem:[%s5 + $0x10] sm:$0xf]
    %v385 = vld [vmem:[%s5 + $0x14] sm:$0xf]
    %v386 = vld [vmem:[%s5 + $0x18] sm:$0xf]
    %v387 = vld [vmem:[%s5 + $0x1c] sm:$0xf]
    %v388 = vld [vmem:[%s5 + $0x20] sm:$0xf]
    %v389 = vld [vmem:[%s5 + $0x24] sm:$0xf]
    %v390 = vld [vmem:[%s5 + $0x28] sm:$0xf]
    %v391 = vld [vmem:[%s5 + $0x2c] sm:$0xf]
    %v392 = vld [vmem:[%s5 + $0x30] sm:$0xf]
    %v393 = vld [vmem:[%s5 + $0x34] sm:$0xf]
    %v394 = vld [vmem:[%s5 + $0x38] sm:$0xf]
    %v395 = vld [vmem:[%s5 + $0x3c] sm:$0xf]
    %v396 = vld [vmem:[%s6] sm:$0x1]
    %v398 = vlaneseq
    %v399 = vshrl.u32 %v398, 7
    %v400 = vsub.s32 0, %v399
    %v401 = vrot.slane %v396, %v400
    %v419 = vunpack.c.l.b16 %v380
    %v420 = vunpack.c.l.b16 %v381
    %v421 = vunpack.c.l.b16 %v382
    %v422 = vunpack.c.l.b16 %v383
    %v423 = vunpack.c.l.b16 %v384
    %v424 = vunpack.c.l.b16 %v385
    %v425 = vunpack.c.l.b16 %v386
    %v426 = vunpack.c.l.b16 %v387
    %v427 = vunpack.c.l.b16 %v388
    %v428 = vunpack.c.l.b16 %v389
    %v429 = vunpack.c.l.b16 %v390
    %v430 = vunpack.c.l.b16 %v391
    %v431 = vunpack.c.l.b16 %v392
    %v432 = vunpack.c.l.b16 %v393
    %v433 = vunpack.c.l.b16 %v394
    %v434 = vunpack.c.l.b16 %v395
    %v435 = vpack.c.b16 %v420, %v419
    %v436 = vpack.c.b16 %v422, %v421
    %v437 = vpack.c.b16 %v424, %v423
    %v438 = vpack.c.b16 %v426, %v425
    %v439 = vpack.c.b16 %v428, %v427
    %v440 = vpack.c.b16 %v430, %v429
    %v441 = vpack.c.b16 %v432, %v431
    %v442 = vpack.c.b16 %v434, %v433
    %451 = vmatprep.subr.bf16.mxu0 0
    %452 = vmatpush1.bf16.msra.mxu0 %v442
    %453 = vmatprep.subr.bf16.mxu0 0
    %454 = vmatpush1.bf16.msra.mxu0 %v441
    %455 = vmatprep.subr.bf16.mxu0 0
    %456 = vmatpush1.bf16.msra.mxu0 %v440
    %457 = vmatprep.subr.bf16.mxu0 0
    %458 = vmatpush1.bf16.msra.mxu0 %v439
    %459 = vmatprep.subr.bf16.mxu0 0
    %460 = vmatpush1.bf16.msra.mxu0 %v438
    %461 = vmatprep.subr.bf16.mxu0 0
    %462 = vmatpush1.bf16.msra.mxu0 %v437
    %463 = vmatprep.subr.bf16.mxu0 0
    %464 = vmatpush1.bf16.msra.mxu0 %v436
    %465 = vmatprep.subr.bf16.mxu0 0
    %466 = vmatpush1.bf16.msra.mxu0 %v435
    %467 = vmatprep.subr.bf16.mxu0 0
    %468 = vmatpush2.bf16.msra.mxu0 0
    %469 = vmatprep.subr.bf16.mxu0 0
    %470 = vmatpush2.bf16.msra.mxu0 0
    %471 = vmatprep.subr.bf16.mxu0 0
    %472 = vmatpush2.bf16.msra.mxu0 0
    %473 = vmatprep.subr.bf16.mxu0 0
    %474 = vmatpush2.bf16.msra.mxu0 0
    %475 = vmatprep.subr.bf16.mxu0 0
    %476 = vmatpush2.bf16.msra.mxu0 0
    %477 = vmatprep.subr.bf16.mxu0 0
    %478 = vmatpush2.bf16.msra.mxu0 0
    %479 = vmatprep.subr.bf16.mxu0 0
    %480 = vmatpush2.bf16.msra.mxu0 0
    %481 = vmatprep.subr.bf16.mxu0 0
    %482 = vmatpush2.bf16.msra.mxu0 0
    %483 = vmatprep.mubr.bf16.mxu0 0
    %484 = vmatmul.mubr.bf16.gmra.mxu0 %v379
    %v485 = vpop.f32.mrf.mxu0
    %v486 = vadd.f32 %v401, %v485
    %v487 = vpop.f32.mrf.mxu0
    %v488 = vpop.f32.mrf.mxu0
    %v489 = vpop.f32.mrf.mxu0
    %490 = vdwg.mxu0
    %v491 = vtanh.pop %v486
    %v492 = vld [vmem:[#allocation4] sm:$0xff]
    %v493 = vld [vmem:[#allocation4 + $0x8] sm:$0xff]
    %v494 = vld [vmem:[#allocation4 + $0x10] sm:$0xff]
    %v495 = vld [vmem:[#allocation4 + $0x18] sm:$0xff]
    %v496 = vld [vmem:[#allocation4 + $0x20] sm:$0xff]
    %v497 = vld [vmem:[#allocation4 + $0x28] sm:$0xff]
    %v498 = vld [vmem:[#allocation4 + $0x30] sm:$0xff]
    %v499 = vld [vmem:[#allocation4 + $0x38] sm:$0xff]
    %v500 = vld [vmem:[%s8] sm:$0x1]
    %v502 = vlaneseq
    %v503 = vshrl.u32 %v502, 7
    %v504 = vsub.s32 0, %v503
    %v505 = vrot.slane %v500, %v504
    %vm507 = vcmask 523264
    %v509 = vsel %vm507, %v491, 0
    %511 = vmatprep.subr.mxu0 0.0
    %512 = vmatpush1.msra.mxu0 0.0
    %513 = vmatprep.subr.mxu0 0.0
    %514 = vmatpush1.msra.mxu0 0.0
    %515 = vmatprep.subr.mxu0 0.0
    %516 = vmatpush1.msra.mxu0 0.0
    %517 = vmatprep.subr.mxu0 0.0
    %518 = vmatpush1.msra.mxu0 0.0
    %519 = vmatprep.subr.mxu0 0.0
    %520 = vmatpush1.msra.mxu0 0.0
    %521 = vmatprep.subr.mxu0 0.0
    %522 = vmatpush1.msra.mxu0 0.0
    %523 = vmatprep.subr.mxu0 0.0
    %524 = vmatpush1.msra.mxu0 0.0
    %525 = vmatprep.subr.mxu0 0.0
    %526 = vmatpush1.msra.mxu0 0.0
    %527 = vmatprep.subr.mxu0 0.0
    %528 = vmatpush1.msra.mxu0 %v499
    %529 = vmatprep.subr.mxu0 0.0
    %530 = vmatpush1.msra.mxu0 %v498
    %531 = vmatprep.subr.mxu0 0.0
    %532 = vmatpush1.msra.mxu0 %v497
    %533 = vmatprep.subr.mxu0 0.0
    %534 = vmatpush1.msra.mxu0 %v496
    %535 = vmatprep.subr.mxu0 0.0
    %536 = vmatpush1.msra.mxu0 %v495
    %537 = vmatprep.subr.mxu0 0.0
    %538 = vmatpush1.msra.mxu0 %v494
    %539 = vmatprep.subr.mxu0 0.0
    %540 = vmatpush1.msra.mxu0 %v493
    %541 = vmatprep.subr.mxu0 0.0
    %542 = vmatpush1.msra.mxu0 %v492
    %543 = vmatprep.subr.mxu0 0.0
    %544 = vmatpush2.msra.mxu0 0.0
    %545 = vmatprep.subr.mxu0 0.0
    %546 = vmatpush2.msra.mxu0 0.0
    %547 = vmatprep.subr.mxu0 0.0
    %548 = vmatpush2.msra.mxu0 0.0
    %549 = vmatprep.subr.mxu0 0.0
    %550 = vmatpush2.msra.mxu0 0.0
    %551 = vmatprep.subr.mxu0 0.0
    %552 = vmatpush2.msra.mxu0 0.0
    %553 = vmatprep.subr.mxu0 0.0
    %554 = vmatpush2.msra.mxu0 0.0
    %555 = vmatprep.subr.mxu0 0.0
    %556 = vmatpush2.msra.mxu0 0.0
    %557 = vmatprep.subr.mxu0 0.0
    %558 = vmatpush2.msra.mxu0 0.0
    %559 = vmatprep.subr.mxu0 0.0
    %560 = vmatpush2.msra.mxu0 0.0
    %561 = vmatprep.subr.mxu0 0.0
    %562 = vmatpush2.msra.mxu0 0.0
    %563 = vmatprep.subr.mxu0 0.0
    %564 = vmatpush2.msra.mxu0 0.0
    %565 = vmatprep.subr.mxu0 0.0
    %566 = vmatpush2.msra.mxu0 0.0
    %567 = vmatprep.subr.mxu0 0.0
    %568 = vmatpush2.msra.mxu0 0.0
    %569 = vmatprep.subr.mxu0 0.0
    %570 = vmatpush2.msra.mxu0 0.0
    %571 = vmatprep.subr.mxu0 0.0
    %572 = vmatpush2.msra.mxu0 0.0
    %573 = vmatprep.subr.mxu0 0.0
    %574 = vmatpush2.msra.mxu0 0.0
    %575 = vmatprep.mubr.f32.mxu0 0.0
    %576 = vmatmul.mubr.f32.gmra.mxu0 %v509
    %v577 = vpop.f32.mrf.mxu0
    %v578 = vadd.f32 %v505, %v577
    %v579 = vpop.f32.mrf.mxu0
    %580 = vdwg.mxu0
    %v581 = vtanh.pop %v578
    %v582 = vld [vmem:[#allocation6] sm:$0xff]
    %v583 = vld [vmem:[#allocation6 + $0x8] sm:$0xff]
    %v584 = vld [vmem:[#allocation6 + $0x10] sm:$0xff]
    %v585 = vld [vmem:[#allocation6 + $0x18] sm:$0xff]
    %v586 = vld [vmem:[#allocation6 + $0x20] sm:$0xff]
    %v587 = vld [vmem:[#allocation6 + $0x28] sm:$0xff]
    %v588 = vld [vmem:[#allocation6 + $0x30] sm:$0xff]
    %v589 = vld [vmem:[#allocation6 + $0x38] sm:$0xff]
    %v590 = vld [vmem:[#allocation6 + $0x40] sm:$0xff]
    %v591 = vld [vmem:[#allocation6 + $0x48] sm:$0xff]
    %v592 = vld [vmem:[#allocation6 + $0x50] sm:$0xff]
    %v593 = vld [vmem:[#allocation6 + $0x58] sm:$0xff]
    %v594 = vld [vmem:[#allocation6 + $0x60] sm:$0xff]
    %v595 = vld [vmem:[#allocation6 + $0x68] sm:$0xff]
    %v596 = vld [vmem:[#allocation6 + $0x70] sm:$0xff]
    %v597 = vld [vmem:[#allocation6 + $0x78] sm:$0xff]
    %v598 = vld [vmem:[%s10] sm:$0x1]
    %v600 = vlaneseq
    %v601 = vshrl.u32 %v600, 7
    %v602 = vsub.s32 0, %v601
    %v603 = vrot.slane %v598, %v602
    %605 = vmatprep.subr.mxu0 0.0
    %606 = vmatpush1.msra.mxu0 %v597
    %607 = vmatprep.subr.mxu0 0.0
    %608 = vmatpush1.msra.mxu0 %v596
    %609 = vmatprep.subr.mxu0 0.0
    %610 = vmatpush1.msra.mxu0 %v595
    %611 = vmatprep.subr.mxu0 0.0
    %612 = vmatpush1.msra.mxu0 %v594
    %613 = vmatprep.subr.mxu0 0.0
    %614 = vmatpush1.msra.mxu0 %v593
    %615 = vmatprep.subr.mxu0 0.0
    %616 = vmatpush1.msra.mxu0 %v592
    %617 = vmatprep.subr.mxu0 0.0
    %618 = vmatpush1.msra.mxu0 %v591
    %619 = vmatprep.subr.mxu0 0.0
    %620 = vmatpush1.msra.mxu0 %v590
    %621 = vmatprep.subr.mxu0 0.0
    %622 = vmatpush1.msra.mxu0 %v589
    %623 = vmatprep.subr.mxu0 0.0
    %624 = vmatpush1.msra.mxu0 %v588
    %625 = vmatprep.subr.mxu0 0.0
    %626 = vmatpush1.msra.mxu0 %v587
    %627 = vmatprep.subr.mxu0 0.0
    %628 = vmatpush1.msra.mxu0 %v586
    %629 = vmatprep.subr.mxu0 0.0
    %630 = vmatpush1.msra.mxu0 %v585
    %631 = vmatprep.subr.mxu0 0.0
    %632 = vmatpush1.msra.mxu0 %v584
    %633 = vmatprep.subr.mxu0 0.0
    %634 = vmatpush1.msra.mxu0 %v583
    %635 = vmatprep.subr.mxu0 0.0
    %636 = vmatpush1.msra.mxu0 %v582
    %637 = vmatprep.subr.mxu0 0.0
    %638 = vmatpush2.msra.mxu0 0.0
    %639 = vmatprep.subr.mxu0 0.0
    %640 = vmatpush2.msra.mxu0 0.0
    %641 = vmatprep.subr.mxu0 0.0
    %642 = vmatpush2.msra.mxu0 0.0
    %643 = vmatprep.subr.mxu0 0.0
    %644 = vmatpush2.msra.mxu0 0.0
    %645 = vmatprep.subr.mxu0 0.0
    %646 = vmatpush2.msra.mxu0 0.0
    %647 = vmatprep.subr.mxu0 0.0
    %648 = vmatpush2.msra.mxu0 0.0
    %649 = vmatprep.subr.mxu0 0.0
    %650 = vmatpush2.msra.mxu0 0.0
    %651 = vmatprep.subr.mxu0 0.0
    %652 = vmatpush2.msra.mxu0 0.0
    %653 = vmatprep.subr.mxu0 0.0
    %654 = vmatpush2.msra.mxu0 0.0
    %655 = vmatprep.subr.mxu0 0.0
    %656 = vmatpush2.msra.mxu0 0.0
    %657 = vmatprep.subr.mxu0 0.0
    %658 = vmatpush2.msra.mxu0 0.0
    %659 = vmatprep.subr.mxu0 0.0
    %660 = vmatpush2.msra.mxu0 0.0
    %661 = vmatprep.subr.mxu0 0.0
    %662 = vmatpush2.msra.mxu0 0.0
    %663 = vmatprep.subr.mxu0 0.0
    %664 = vmatpush2.msra.mxu0 0.0
    %665 = vmatprep.subr.mxu0 0.0
    %666 = vmatpush2.msra.mxu0 0.0
    %667 = vmatprep.subr.mxu0 0.0
    %668 = vmatpush2.msra.mxu0 0.0
    %669 = vmatprep.mubr.f32.mxu0 0.0
    %670 = vmatmul.mubr.f32.gmra.mxu0 %v581
    %v671 = vpop.f32.mrf.mxu0
    %v672 = vadd.f32 %v603, %v671
    %v673 = vpop.f32.mrf.mxu0
    %674 = vdwg.mxu0
    %vm675 = vcmask 15360
    %676 = vst.msk [vmem:[%s11] sm:$0xff] %vm675, %v672
    // Predicated region
    $region58: #{tpu_custom_call.1} parent=1 // pred_check
      _
    $region59: #{tpu_custom_call.1} parent=1 // pred_check_branch
      %678 = sbr.rel (0) target = $region61
    $region60: #{tpu_custom_call.1} parent=1 // pred_region
      _
    $region61: #{tpu_custom_call.1} parent=1 // pred_fallthru
      _
    // Predicated region
    $region62: #{tpu_custom_call.1} parent=1 // pred_check
      _
    $region63: #{tpu_custom_call.1} parent=1 // pred_check_branch
      %680 = sbr.rel (0) target = $region65
    $region64: #{tpu_custom_call.1} parent=1 // pred_region
      _
    $region65: #{tpu_custom_call.1} parent=1 // pred_fallthru
      _
    %681 = vsyncpa [#allocation3], 1
    %682 = vsyncpa [#allocation5], 1

</llo_original>
